<compile_context>
chip_gen: v6e
topology: v6e:2x2x1
jax: 0.10.0
libtpu: 0.0.40
codegen_flags: <defaults>
</compile_context>

<pallas_src>
import jax
import jax.numpy as jnp
from jax import lax
from jax.experimental import pallas as pl
from jax.experimental.pallas import tpu as pltpu


# ---------------------------------------------------------------------------
# Kernels
# ---------------------------------------------------------------------------
def _make_kernel(multi_k: bool, has_bias: bool):
    """Build the kernel body for (multi-K-step?, has-bias?)."""

    def _dot(x_ref, w_ref):
        # x tile: (tm, tk); W tile: (tn, tk)  (PyTorch [out, in] layout).
        # Contract K dims directly (== x @ W.T); no transpose of W needed.
        return lax.dot_general(
            x_ref[...],
            w_ref[...],
            dimension_numbers=(((1,), (1,)), ((), ())),
            preferred_element_type=jnp.float32,
        )

    if not multi_k:
        # Single K step: no accumulator scratch, no pl.when phases.
        if has_bias:
            def kernel(x_ref, w_ref, b_ref, o_ref):
                acc = _dot(x_ref, w_ref) + b_ref[...].astype(jnp.float32)
                o_ref[...] = acc.astype(o_ref.dtype)
        else:
            def kernel(x_ref, w_ref, o_ref):
                o_ref[...] = _dot(x_ref, w_ref).astype(o_ref.dtype)
        return kernel

    # Multi K step: grid = (i, j, k) with k the reduction ("arbitrary") axis.
    if has_bias:
        def kernel(x_ref, w_ref, b_ref, o_ref, acc_ref):
            k = pl.program_id(2)

            @pl.when(k == 0)
            def _():
                # Fold the bias into the accumulator init.
                acc_ref[...] = jnp.broadcast_to(
                    b_ref[...].astype(jnp.float32), acc_ref.shape
                )

            acc_ref[...] += _dot(x_ref, w_ref)

            @pl.when(k == pl.num_programs(2) - 1)
            def _():
                o_ref[...] = acc_ref[...].astype(o_ref.dtype)
    else:
        def kernel(x_ref, w_ref, o_ref, acc_ref):
            k = pl.program_id(2)

            @pl.when(k == 0)
            def _():
                acc_ref[...] = jnp.zeros_like(acc_ref)

            acc_ref[...] += _dot(x_ref, w_ref)

            @pl.when(k == pl.num_programs(2) - 1)
            def _():
                o_ref[...] = acc_ref[...].astype(o_ref.dtype)

    return kernel


# ---------------------------------------------------------------------------
# Tile selection / padding helpers
# ---------------------------------------------------------------------------
def _round_up(x, m):
    return ((x + m - 1) // m) * m


def _select_tiles(M, N, K, compute_dtype, tm, tn, tk):
    itemsize = jnp.dtype(compute_dtype).itemsize
    m_align = 8 if itemsize >= 4 else (16 if itemsize == 2 else 32)

    # K tile: take the whole (128-padded) K when it fits (<= 2048) so the
    # reduction axis disappears entirely; otherwise step in 2048 chunks.
    if tk is None:
        k128 = _round_up(K, 128)
        tk = k128 if k128 <= 2048 else 2048

    # Big tiles for arithmetic intensity; tm grows with M (weight reuse term).
    if tm is None:
        tm = min(1024, _round_up(M, m_align))

    if tn is None:
        tn = min(1024, _round_up(N, 128))
        # v7x has 2 TensorCores sharded over the "parallel" grid axes: if the
        # (i, j) grid would collapse to a single block, split N so both TCs
        # get work (only possible when N spans >= 2 lanes-of-128).
        n128 = _round_up(N, 128)
        grid_i = _round_up(M, tm) // tm
        grid_j = _round_up(N, tn) // tn
        if grid_i == 1 and grid_j == 1 and n128 >= 256:
            tn = _round_up(-(-n128 // 2), 128)

    Mp = _round_up(M, tm)
    Np = _round_up(N, tn)
    Kp = _round_up(K, tk)
    return tm, tn, tk, Mp, Np, Kp


# ---------------------------------------------------------------------------
# Wrapper
# ---------------------------------------------------------------------------
def phi_linear(x, W, b=None, *, compute_dtype=jnp.bfloat16,
               tm=None, tn=None, tk=None,
               vmem_limit_bytes=48 * 1024 * 1024):
    """F.linear(x, W, b) == x @ W.T + b.

    x: (..., K), W: (N, K) [PyTorch layout], b: (N,) or None.
    Matmul operands are fed to the MXU in `compute_dtype` (default bf16);
    accumulation and bias addition stay in f32; output keeps x.dtype.
    """
    orig_shape = x.shape
    out_dtype = x.dtype
    K = orig_shape[-1]
    x2 = x.reshape(-1, K)                       # flatten leading dims
    M = x2.shape[0]
    N, K2 = W.shape
    assert K == K2, "in_features mismatch"
    has_bias = b is not None

    tm, tn, tk, Mp, Np, Kp = _select_tiles(M, N, K, compute_dtype, tm, tn, tk)
    assert tm % 8 == 0 and tn % 128 == 0 and tk % 128 == 0

    # Zero-pad up to tile multiples (zero rows / zero K columns contribute
    # nothing to the contraction; extra N columns are sliced off below).
    xp = x2 if (Mp, Kp) == (M, K) else jnp.pad(x2, ((0, Mp - M), (0, Kp - K)))
    Wp = W if (Np, Kp) == (N, K) else jnp.pad(W, ((0, Np - N), (0, Kp - K)))
    xp = xp.astype(compute_dtype)
    Wp = Wp.astype(compute_dtype)

    if has_bias:
        bp = b.reshape(1, N).astype(jnp.float32)
        if Np != N:
            bp = jnp.pad(bp, ((0, 0), (0, Np - N)))

    grid_i, grid_j, grid_k = Mp // tm, Np // tn, Kp // tk
    multi_k = grid_k > 1
    kernel = _make_kernel(multi_k, has_bias)

    in_itemsize = jnp.dtype(compute_dtype).itemsize
    cost = pl.CostEstimate(
        flops=2 * Mp * Np * Kp,
        transcendentals=0,
        bytes_accessed=(Mp * Kp * grid_j + Kp * Np * grid_i) * in_itemsize
        + (Np * 4 if has_bias else 0)
        + Mp * Np * jnp.dtype(out_dtype).itemsize,
    )

    if multi_k:
        grid = (grid_i, grid_j, grid_k)
        in_specs = [
            pl.BlockSpec((tm, tk), lambda i, j, k: (i, k)),   # x tile
            pl.BlockSpec((tn, tk), lambda i, j, k: (j, k)),   # W tile ([N, K])
        ]
        if has_bias:
            in_specs.append(pl.BlockSpec((1, tn), lambda i, j, k: (0, j)))
        out_specs = pl.BlockSpec((tm, tn), lambda i, j, k: (i, j))
        scratch_shapes = [pltpu.VMEM((tm, tn), jnp.float32)]
        dim_sem = ("parallel", "parallel", "arbitrary")
    else:
        grid = (grid_i, grid_j)
        in_specs = [
            pl.BlockSpec((tm, tk), lambda i, j: (i, 0)),      # x tile
            pl.BlockSpec((tn, tk), lambda i, j: (j, 0)),      # W tile ([N, K])
        ]
        if has_bias:
            in_specs.append(pl.BlockSpec((1, tn), lambda i, j: (0, j)))
        out_specs = pl.BlockSpec((tm, tn), lambda i, j: (i, j))
        scratch_shapes = []
        dim_sem = ("parallel", "parallel")

    args = (xp, Wp, bp) if has_bias else (xp, Wp)

    out = pl.pallas_call(
        kernel,
        out_shape=jax.ShapeDtypeStruct((Mp, Np), out_dtype),
        grid=grid,
        in_specs=in_specs,
        out_specs=out_specs,
        scratch_shapes=scratch_shapes,
        compiler_params=pltpu.CompilerParams(
            dimension_semantics=dim_sem,
            vmem_limit_bytes=vmem_limit_bytes,
        ),
        cost_estimate=cost,
    )(*args)

    if (Mp, Np) != (M, N):
        out = out[:M, :N]
    return out.reshape(*orig_shape[:-1], N)


# ---------------------------------------------------------------------------
# Self-test
# ---------------------------------------------------------------------------
if __name__ == "__main__":
    key = jax.random.PRNGKey(0)
    kx, kw, kb = jax.random.split(key, 3)

    # --- Small shapes consistent with the module: batch=2, seq=8, in=32, out=64.
    B, S, K, N = 2, 8, 32, 64
    x = jax.random.normal(kx, (B, S, K), dtype=jnp.float32)
    W = jax.random.normal(kw, (N, K), dtype=jnp.float32) * 0.05   # PyTorch [out, in]
    b = jax.random.normal(kb, (N,), dtype=jnp.float32)
    y_ref = jnp.einsum("bsk,nk->bsn", x, W) + b

    # Default path: bf16 MXU operands, f32 accumulation.
    y = phi_linear(x, W, b)
    jax.block_until_ready(y)
    assert y.shape == (B, S, N)
    assert jnp.allclose(y, y_ref, atol=5e-2, rtol=5e-2), "bf16 path mismatch"

    # Exact-parity path: f32 operands.
    y_f32 = phi_linear(x, W, b, compute_dtype=jnp.float32)
    jax.block_until_ready(y_f32)
    assert jnp.allclose(y_f32, y_ref, atol=1e-4, rtol=1e-4), "f32 path mismatch"

    # No-bias path (F.linear allows bias=None).
    y_nb = phi_linear(x, W, None, compute_dtype=jnp.float32)
    jax.block_until_ready(y_nb)
    assert jnp.allclose(y_nb, y_ref - b, atol=1e-4, rtol=1e-4), "no-bias mismatch"

    # --- Ragged shapes + multi-K-step accumulator path (padding, bias-folded
    # init, finalize, and the >=2-parallel-block tn split all exercised).
    M2, K2, N2 = 100, 512, 200          # none are tile-aligned
    x2 = jax.random.normal(kx, (M2, K2), dtype=jnp.float32)
    W2 = jax.random.normal(kw, (N2, K2), dtype=jnp.float32) * 0.05
    b2 = jax.random.normal(kb, (N2,), dtype=jnp.float32)
    y2 = phi_linear(x2, W2, b2, tk=128)          # forces 4 K steps
    jax.block_until_ready(y2)
    y2_ref = x2 @ W2.T + b2
    assert y2.shape == (M2, N2)
    assert jnp.allclose(y2, y2_ref, atol=5e-2, rtol=5e-2), "tiled/padded mismatch"

    print("KERNEL_OK")
</pallas_src>

<mosaic_0001>
module attributes {stable_mosaic.version = 11 : i64} {
  func.func @kernel(%arg0: i32, %arg1: i32, %arg2: memref<16x128xbf16, #tpu.memory_space<vmem>>, %arg3: memref<128x128xbf16, #tpu.memory_space<vmem>>, %arg4: memref<1x128xf32, #tpu.memory_space<vmem>>, %arg5: memref<16x128xf32, #tpu.memory_space<vmem>>) attributes {dimension_semantics = [#tpu.dimension_semantics<parallel>, #tpu.dimension_semantics<parallel>], iteration_bounds = array<i64: 1, 1>, scalar_prefetch = 0 : i64, scratch_operands = 0 : i64, tpu.core_type = #tpu.core_type<tc>, window_params = [{transform_indices = @transform_0, window_bounds = array<i64: 16, 128>}, {transform_indices = @transform_1, window_bounds = array<i64: 128, 128>}, {transform_indices = @transform_2, window_bounds = array<i64: 1, 128>}, {transform_indices = @transform_3, window_bounds = array<i64: 16, 128>}]} {
    %c0 = arith.constant 0 : index
    %c0_0 = arith.constant 0 : index
    %0 = vector.load %arg2[%c0, %c0_0] : memref<16x128xbf16, #tpu.memory_space<vmem>>, vector<16x128xbf16>
    %c0_1 = arith.constant 0 : index
    %c0_2 = arith.constant 0 : index
    %1 = vector.load %arg3[%c0_1, %c0_2] : memref<128x128xbf16, #tpu.memory_space<vmem>>, vector<128x128xbf16>
    %cst = arith.constant dense<0.000000e+00> : vector<16x128xf32>
    %2 = tpu.matmul %0, %1, %cst {dimension_numbers = #tpu.dot_dimension_numbers<[1], [1], [0], [0], [0, 0, 1, 0], [], []>} : vector<16x128xbf16>, vector<128x128xbf16>, vector<16x128xf32> -> vector<16x128xf32>
    %c0_3 = arith.constant 0 : index
    %c0_4 = arith.constant 0 : index
    %3 = vector.load %arg4[%c0_3, %c0_4] : memref<1x128xf32, #tpu.memory_space<vmem>>, vector<1x128xf32>
    %4 = vector.broadcast %3 : vector<1x128xf32> to vector<16x128xf32>
    %5 = arith.addf %2, %4 : vector<16x128xf32>
    %c0_5 = arith.constant 0 : index
    %c0_6 = arith.constant 0 : index
    %6 = vector.load %arg5[%c0_5, %c0_6] : memref<16x128xf32, #tpu.memory_space<vmem>>, vector<16x128xf32>
    tpu.vector_store %arg5[%c0_5, %c0_6], %5 {strides = array<i32>} : memref<16x128xf32, #tpu.memory_space<vmem>>, vector<16x128xf32>,
    return
  }
  func.func @transform_0(%arg0: i32, %arg1: i32) -> (i32, i32) {
    %c0_i32 = arith.constant 0 : i32
    %c0_i32_0 = arith.constant 0 : i32
    return %arg0, %c0_i32 : i32, i32
  }
  func.func @transform_1(%arg0: i32, %arg1: i32) -> (i32, i32) {
    %c0_i32 = arith.constant 0 : i32
    %c0_i32_0 = arith.constant 0 : i32
    return %arg1, %c0_i32 : i32, i32
  }
  func.func @transform_2(%arg0: i32, %arg1: i32) -> (i32, i32) {
    %c0_i32 = arith.constant 0 : i32
    %c0_i32_0 = arith.constant 0 : i32
    return %c0_i32, %arg1 : i32, i32
  }
  func.func @transform_3(%arg0: i32, %arg1: i32) -> (i32, i32) {
    %c0_i32 = arith.constant 0 : i32
    return %arg0, %arg1 : i32, i32
  }
}

</mosaic_0001>

<llo_original>
// kernel: tpu_custom_call.1
$region0: #{tpu_custom_call.1}
  #allocation0 [shape = 'u32[]', space=smem, size = 0x4, offset = 0x4, fixed_abs, tag = 'smem constant byte address 0x4 - core index']
  #allocation1 [shape = 'u32[144,128]{1,0:T(1,128)}', space=vmem, size = 0x12000, scoped, tag = 'internal scratch']
  %s0 = inlined_call_operand.hbm [shape: bf16[16,128], index: 0, kind: input, shape index: {}]
  %s1 = inlined_call_operand.hbm [shape: bf16[128,128], index: 1, kind: input, shape index: {}]
  %s2 = inlined_call_operand.vmem [shape: f32[1,128], index: 2, kind: input, shape index: {}]
  %s3 = inlined_call_operand.hbm [shape: f32[16,128], index: 3, kind: output, shape index: {}]
  %s4 = sld [smem:[#allocation0]]
  $region30: #{tpu_custom_call.1} parent=0
    _
  %s6 = ssub.s32 1, %s4
  %s7 = scalar_select 0, %s6, %s4
  $region1: #{tpu_custom_call.1} parent=0
    #allocation2 [shape = 'u8[4096]{0}', space=vmem, size = 0x1000, scoped, tag = 'input window, operand 0, single buffered']
    #allocation3 [shape = 's32[1]{0}', space=sflag, size = 0x4, scoped, tag = 'scoped memory for tpu_custom_call.1']
    #allocation4 [shape = 's32[1]{0}', space=sflag, size = 0x4, scoped, tag = 'scoped memory for tpu_custom_call.1']
    #allocation5 [shape = 'u8[32768]{0}', space=vmem, size = 0x8000, scoped, tag = 'input window, operand 1, single buffered']
    #allocation6 [shape = 's32[1]{0}', space=sflag, size = 0x4, scoped, tag = 'scoped memory for tpu_custom_call.1']
    #allocation7 [shape = 'u8[8192]{0}', space=vmem, size = 0x2000, scoped, tag = 'output window, operand 0, single buffered']
    %8 = vsyncpa [#allocation3], 0
    %9 = vsyncpa [#allocation6], 0
    %10 = vsyncpa [#allocation4], 0
    // Predicated region
    $region2: #{tpu_custom_call.1} parent=1 // pred_check
      _
    $region3: #{tpu_custom_call.1} parent=1 // pred_check_branch
      %12 = sbr.rel (0) target = $region5
    $region4: #{tpu_custom_call.1} parent=1 // pred_region
      %s14 = ssub.s32 128, 128
      %15 = vsyncadd [#allocation3], %s14
      %s16 = sshll.u32 [#allocation2], 4
      %s17 = int_to_ptr.vmem [resolvable:$true] %s16
      %22 = dma.hbm_to_vmem [thread:$0]  %s0, 128, %s17, [#allocation3], 64, 64, 4
    $region5: #{tpu_custom_call.1} parent=1 // pred_fallthru
      _
    // Predicated region
    $region6: #{tpu_custom_call.1} parent=1 // pred_check
      _
    $region7: #{tpu_custom_call.1} parent=1 // pred_check_branch
      %24 = sbr.rel (0) target = $region9
    $region8: #{tpu_custom_call.1} parent=1 // pred_region
      %s26 = ssub.s32 1024, 1024
      %27 = vsyncadd [#allocation6], %s26
      %s28 = sshll.u32 [#allocation5], 4
      %s29 = int_to_ptr.vmem [resolvable:$true] %s28
      %34 = dma.hbm_to_vmem [thread:$0]  %s1, 1024, %s29, [#allocation6], 64, 64, 4
    $region9: #{tpu_custom_call.1} parent=1 // pred_fallthru
      _
    // Predicated region
    $region10: #{tpu_custom_call.1} parent=1 // pred_check
      _
    $region11: #{tpu_custom_call.1} parent=1 // pred_check_branch
      %36 = sbr.rel (0) target = $region13
    $region12: #{tpu_custom_call.1} parent=1 // pred_region
      _
    $region13: #{tpu_custom_call.1} parent=1 // pred_fallthru
      _
    // Predicated region
    $region14: #{tpu_custom_call.1} parent=1 // pred_check
      _
    $region15: #{tpu_custom_call.1} parent=1 // pred_check_branch
      %38 = sbr.rel (0) target = $region17
    $region16: #{tpu_custom_call.1} parent=1 // pred_region
      %39 = dma.done [#allocation3], 128
    $region17: #{tpu_custom_call.1} parent=1 // pred_fallthru
      _
    // Predicated region
    $region18: #{tpu_custom_call.1} parent=1 // pred_check
      _
    $region19: #{tpu_custom_call.1} parent=1 // pred_check_branch
      %41 = sbr.rel (0) target = $region21
    $region20: #{tpu_custom_call.1} parent=1 // pred_region
      %42 = dma.done [#allocation6], 1024
    $region21: #{tpu_custom_call.1} parent=1 // pred_fallthru
      _
    %v44 = vld [vmem:[#allocation2] sm:$0xf]
    %v45 = vld [vmem:[#allocation2 + $0x4] sm:$0xf]
    %v46 = vld [vmem:[#allocation5] sm:$0xf]
    %v47 = vld [vmem:[#allocation5 + $0x4] sm:$0xf]
    %v48 = vld [vmem:[#allocation5 + $0x8] sm:$0xf]
    %v49 = vld [vmem:[#allocation5 + $0xc] sm:$0xf]
    %v50 = vld [vmem:[#allocation5 + $0x10] sm:$0xf]
    %v51 = vld [vmem:[#allocation5 + $0x14] sm:$0xf]
    %v52 = vld [vmem:[#allocation5 + $0x18] sm:$0xf]
    %v53 = vld [vmem:[#allocation5 + $0x1c] sm:$0xf]
    %v54 = vld [vmem:[#allocation5 + $0x20] sm:$0xf]
    %v55 = vld [vmem:[#allocation5 + $0x24] sm:$0xf]
    %v56 = vld [vmem:[#allocation5 + $0x28] sm:$0xf]
    %v57 = vld [vmem:[#allocation5 + $0x2c] sm:$0xf]
    %v58 = vld [vmem:[#allocation5 + $0x30] sm:$0xf]
    %v59 = vld [vmem:[#allocation5 + $0x34] sm:$0xf]
    %v60 = vld [vmem:[#allocation5 + $0x38] sm:$0xf]
    %v61 = vld [vmem:[#allocation5 + $0x3c] sm:$0xf]
    %v62 = vld [vmem:[%s2] sm:$0x1]
    %v64 = vlaneseq
    %v65 = vshrl.u32 %v64, 7
    %v66 = vsub.s32 0, %v65
    %v67 = vrot.slane %v62, %v66
    %v71 = vunpack.c.l.b16 %v44
    %v72 = vunpack.c.l.b16 %v45
    %v73 = vpack.c.b16 %v72, %v71
    %v91 = vunpack.c.l.b16 %v46
    %v92 = vunpack.c.l.b16 %v47
    %v93 = vunpack.c.l.b16 %v48
    %v94 = vunpack.c.l.b16 %v49
    %v95 = vunpack.c.l.b16 %v50
    %v96 = vunpack.c.l.b16 %v51
    %v97 = vunpack.c.l.b16 %v52
    %v98 = vunpack.c.l.b16 %v53
    %v99 = vunpack.c.l.b16 %v54
    %v100 = vunpack.c.l.b16 %v55
    %v101 = vunpack.c.l.b16 %v56
    %v102 = vunpack.c.l.b16 %v57
    %v103 = vunpack.c.l.b16 %v58
    %v104 = vunpack.c.l.b16 %v59
    %v105 = vunpack.c.l.b16 %v60
    %v106 = vunpack.c.l.b16 %v61
    %v107 = vpack.c.b16 %v92, %v91
    %v108 = vpack.c.b16 %v94, %v93
    %v109 = vpack.c.b16 %v96, %v95
    %v110 = vpack.c.b16 %v98, %v97
    %v111 = vpack.c.b16 %v100, %v99
    %v112 = vpack.c.b16 %v102, %v101
    %v113 = vpack.c.b16 %v104, %v103
    %v114 = vpack.c.b16 %v106, %v105
    %123 = vmatprep.subr.bf16.mxu0 0
    %124 = vmatpush1.bf16.xpose.msra.mxu0 %v114
    %125 = vmatprep.subr.bf16.mxu0 0
    %126 = vmatpush1.bf16.xpose.msra.mxu0 %v113
    %127 = vmatprep.subr.bf16.mxu0 0
    %128 = vmatpush1.bf16.xpose.msra.mxu0 %v112
    %129 = vmatprep.subr.bf16.mxu0 0
    %130 = vmatpush1.bf16.xpose.msra.mxu0 %v111
    %131 = vmatprep.subr.bf16.mxu0 0
    %132 = vmatpush1.bf16.xpose.msra.mxu0 %v110
    %133 = vmatprep.subr.bf16.mxu0 0
    %134 = vmatpush1.bf16.xpose.msra.mxu0 %v109
    %135 = vmatprep.subr.bf16.mxu0 0
    %136 = vmatpush1.bf16.xpose.msra.mxu0 %v108
    %137 = vmatprep.subr.bf16.mxu0 0
    %138 = vmatpush1.bf16.xpose.msra.mxu0 %v107
    %139 = vmatprep.subr.bf16.mxu0 0
    %140 = vmatpush2.bf16.xpose.msra.mxu0 0
    %141 = vmatprep.subr.bf16.mxu0 0
    %142 = vmatpush2.bf16.xpose.msra.mxu0 0
    %143 = vmatprep.subr.bf16.mxu0 0
    %144 = vmatpush2.bf16.xpose.msra.mxu0 0
    %145 = vmatprep.subr.bf16.mxu0 0
    %146 = vmatpush2.bf16.xpose.msra.mxu0 0
    %147 = vmatprep.subr.bf16.mxu0 0
    %148 = vmatpush2.bf16.xpose.msra.mxu0 0
    %149 = vmatprep.subr.bf16.mxu0 0
    %150 = vmatpush2.bf16.xpose.msra.mxu0 0
    %151 = vmatprep.subr.bf16.mxu0 0
    %152 = vmatpush2.bf16.xpose.msra.mxu0 0
    %153 = vmatprep.subr.bf16.mxu0 0
    %154 = vmatpush2.bf16.xpose.msra.mxu0 0
    %155 = vmatprep.mubr.bf16.mxu0 0
    %156 = vmatmul.mubr.bf16.gmra.mxu0 %v73
    %v157 = vpop.f32.mrf.mxu0
    %v158 = vadd.f32 %v67, %v157
    %v159 = vpop.f32.mrf.mxu0
    %v160 = vpop.f32.mrf.mxu0
    %v161 = vadd.f32 %v67, %v160
    %v162 = vpop.f32.mrf.mxu0
    %163 = vdwg.mxu0
    %164 = vst [vmem:[#allocation7] sm:$0xff] %v158
    %165 = vst [vmem:[#allocation7 + $0x8] sm:$0xff] %v161
    // Predicated region
    $region22: #{tpu_custom_call.1} parent=1 // pred_check
      _
    $region23: #{tpu_custom_call.1} parent=1 // pred_check_branch
      %167 = sbr.rel (0) target = $region25
    $region24: #{tpu_custom_call.1} parent=1 // pred_region
      %s169 = ssub.s32 256, 256
      %170 = vsyncadd [#allocation4], %s169
      %s171 = sshll.u32 [#allocation7], 4
      %s172 = int_to_ptr.vmem [resolvable:$true] %s171
      %177 = dma.vmem_to_hbm [thread:$0]  %s172, 256, %s3, [#allocation4], 128, 128, 8
    $region25: #{tpu_custom_call.1} parent=1 // pred_fallthru
      _
    // Predicated region
    $region26: #{tpu_custom_call.1} parent=1 // pred_check
      _
    $region27: #{tpu_custom_call.1} parent=1 // pred_check_branch
      %179 = sbr.rel (0) target = $region29
    $region28: #{tpu_custom_call.1} parent=1 // pred_region
      %180 = dma.done [#allocation4], 256
    $region29: #{tpu_custom_call.1} parent=1 // pred_fallthru
      _
    %181 = vsyncpa [#allocation3], 1
    %182 = vsyncpa [#allocation6], 1
    %183 = vsyncpa [#allocation4], 1

</llo_original>
